<compile_context>
chip_gen: v7x
topology: tpu7x:2x2x1
jax: 0.10.0
libtpu: 0.0.40
codegen_flags: <defaults>
</compile_context>

<pallas_src>
import numpy as np
import jax
import jax.numpy as jnp
from jax import lax
from jax.experimental import pallas as pl
from jax.experimental.pallas import tpu as pltpu


def _round_up(x, m):
    return (x + m - 1) // m * m


# ------------------------------------------------------------------ fused Pallas kernel

def _depprobe_kernel(emb0_ref, emb1_ref, mask_ref, w_arc_ref, w_lbl_ref,
                     dep_ref, dist_ref, lbl_ref):
    # emb0_ref : (R, E)       R = B * Lp flattened rows (arc embeddings)
    # emb1_ref : (R, E)       label embeddings
    # mask_ref : (R, 1) int32 1 = real token, 0 = padding
    # w_arc_ref: (E, Dp)      arc weight, pre-transposed, zero lane-padding
    # w_lbl_ref: (E, NLp)     label weight, pre-transposed, zero lane-padding
    # dep_ref  : (R, Dp)      dependency embeddings (f32, lane-dense)
    # dist_ref : (B, Lp, Lp)  pairwise squared L2 distances per batch element
    # lbl_ref  : (R, NLp)     label logits, -inf on padded rows (lane-dense)

    # --- arc transform: one lane-dense matmul over all rows (MXU) ---
    dep = jnp.dot(emb0_ref[...], w_arc_ref[...],
                  preferred_element_type=jnp.float32)              # (R, Dp) f32
    dep_ref[...] = dep

    # --- label logits: one lane-dense matmul + padding mask (-inf) ---
    logits = jnp.dot(emb1_ref[...], w_lbl_ref[...],
                     preferred_element_type=jnp.float32)           # (R, NLp) f32
    lbl_ref[...] = jnp.where(mask_ref[...] != 0, logits, -jnp.inf)

    # --- pairwise squared distances per batch via Gram identity on the MXU ---
    # dist[i, j] = ||dep_i||^2 + ||dep_j||^2 - 2 <dep_i, dep_j>
    B, Lp, _ = dist_ref.shape
    row_ids = lax.broadcasted_iota(jnp.int32, (Lp, Lp), 0)
    col_ids = lax.broadcasted_iota(jnp.int32, (Lp, Lp), 1)
    eye = row_ids == col_ids                                       # hoisted out of the loop
    for b in range(B):                                             # static unroll, B small
        dep_b = dep[b * Lp:(b + 1) * Lp, :]                        # (Lp, Dp) static slice
        # gram = dep_b @ dep_b^T, contracting the shared last axis (no transpose op)
        g = lax.dot_general(dep_b, dep_b,
                            dimension_numbers=(((1,), (1,)), ((), ())),
                            preferred_element_type=jnp.float32)    # (Lp, Lp)
        # squared norms taken from the Gram diagonal -> exact 0 on the distance diagonal
        g_diag = jnp.where(eye, g, 0.0)
        sq_col = jnp.sum(g_diag, axis=1, keepdims=True)            # (Lp, 1) = ||dep_i||^2
        sq_row = jnp.sum(g_diag, axis=0, keepdims=True)            # (1, Lp) = ||dep_j||^2
        dist = jnp.maximum(sq_col + sq_row - 2.0 * g, 0.0)
        dist_ref[b] = dist


# ------------------------------------------------------------------ wrapper

def depprobe_forward(emb0, emb1, att_mask, w_arc, w_lbl, matmul_dtype=jnp.float32):
    """Fused arc + label forward.

    Returns (dep_embeddings (B,L,D), distances (B,L,L), label_logits (B,L,NL)).
    Set matmul_dtype=jnp.bfloat16 on v6e/v7x for higher MXU throughput (f32 accumulation
    is kept either way; the reference tolerance in __main__ assumes f32 inputs).
    """
    B, L, E = emb0.shape
    D = w_arc.shape[0]
    NL = w_lbl.shape[0]
    Lp = _round_up(L, 8)       # sublane-align the sequence axis
    Dp = _round_up(D, 128)     # lane-dense dep output
    NLp = _round_up(NL, 128)   # lane-dense logits output
    R = B * Lp

    # zero-pad sequence (sublane) and output (lane) dims; slice back after the call
    # (pure layout plumbing -- zero padding does not change any dot product).
    emb0_p = jnp.zeros((B, Lp, E), jnp.float32).at[:, :L, :].set(emb0).reshape(R, E)
    emb1_p = jnp.zeros((B, Lp, E), jnp.float32).at[:, :L, :].set(emb1).reshape(R, E)
    mask_p = (jnp.zeros((B, Lp), jnp.int32)
              .at[:, :L].set(att_mask.astype(jnp.int32)).reshape(R, 1))
    # one-time host-side transpose of the (out, in) torch-Linear weights -> (in, out_padded)
    w_arc_t = jnp.zeros((E, Dp), jnp.float32).at[:, :D].set(w_arc.T)
    w_lbl_t = jnp.zeros((E, NLp), jnp.float32).at[:, :NL].set(w_lbl.T)

    emb0_p = emb0_p.astype(matmul_dtype)
    emb1_p = emb1_p.astype(matmul_dtype)
    w_arc_t = w_arc_t.astype(matmul_dtype)
    w_lbl_t = w_lbl_t.astype(matmul_dtype)

    dep_p, dist_p, lbl_p = pl.pallas_call(
        _depprobe_kernel,
        out_shape=(jax.ShapeDtypeStruct((R, Dp), jnp.float32),
                   jax.ShapeDtypeStruct((B, Lp, Lp), jnp.float32),
                   jax.ShapeDtypeStruct((R, NLp), jnp.float32)),
        grid=(1,),
        in_specs=[pl.BlockSpec((R, E), lambda i: (0, 0)),
                  pl.BlockSpec((R, E), lambda i: (0, 0)),
                  pl.BlockSpec((R, 1), lambda i: (0, 0)),
                  pl.BlockSpec((E, Dp), lambda i: (0, 0)),
                  pl.BlockSpec((E, NLp), lambda i: (0, 0))],
        out_specs=(pl.BlockSpec((R, Dp), lambda i: (0, 0)),
                   pl.BlockSpec((B, Lp, Lp), lambda i: (0, 0, 0)),
                   pl.BlockSpec((R, NLp), lambda i: (0, 0))),
        compiler_params=pltpu.CompilerParams(dimension_semantics=("arbitrary",)),
    )(emb0_p, emb1_p, mask_p, w_arc_t, w_lbl_t)

    dep = dep_p.reshape(B, Lp, Dp)[:, :L, :D]
    dist = dist_p[:, :L, :L]
    lbl = lbl_p.reshape(B, Lp, NLp)[:, :L, :NL]
    return dep, dist, lbl


# ------------------------------------------------------------------ decode (plain JAX / host)

def get_labels(lbl_logits, root_label):
    # softmax -> nan_to_num(nan=-inf) -> root/labels argmax, matching LabelClassifier.get_labels
    probs = jax.nn.softmax(lbl_logits, axis=-1)
    probs = jnp.where(jnp.isnan(probs), -jnp.inf, probs)
    roots = jnp.argmax(probs[:, :, root_label], axis=-1)
    probs_noroot = probs.at[:, :, root_label].set(-jnp.inf)
    labels = jnp.argmax(probs_noroot, axis=-1)
    labels = labels.at[jnp.arange(lbl_logits.shape[0]), roots].set(root_label)
    labels = jnp.where(probs[:, :, 0] == -jnp.inf, -1, labels)
    return roots, labels


def to_graph(roots, distances, mask):
    # TODO(synk): greedy, data-dependent tree growth (Prim-like) is inherently sequential;
    # implemented on host with numpy instead of inside a Pallas kernel.
    roots = np.asarray(roots)
    distances = np.asarray(distances)
    mask = np.asarray(mask)
    graphs = np.full(mask.shape, -2, dtype=np.int64)
    for sidx in range(graphs.shape[0]):
        sen_len = int(mask[sidx].sum())
        sen_root = int(roots[sidx])
        graphs[sidx, sen_root] = -1
        tree_nodes = [sen_root]
        free_nodes = [n for n in range(sen_len) if n != sen_root]
        while free_nodes:
            cur = distances[sidx][np.array(tree_nodes)][:, np.array(free_nodes)]
            min_idx = int(np.argmin(cur))
            min_tree = tree_nodes[min_idx // len(free_nodes)]
            min_free = free_nodes[min_idx % len(free_nodes)]
            graphs[sidx, min_free] = min_tree
            tree_nodes.append(min_free)
            free_nodes.remove(min_free)
    return graphs


# ------------------------------------------------------------------ synthetic embedding model

class SyntheticEmbModel:
    """Stand-in for the frozen `emb_model`: returns two embedding layers + attention mask."""

    def __init__(self, key, vocab_size, emb_dim):
        self.emb_dim = emb_dim
        k0, k1 = jax.random.split(key)
        self.table0 = jax.random.normal(k0, (vocab_size, emb_dim), jnp.float32)
        self.table1 = jax.random.normal(k1, (vocab_size, emb_dim), jnp.float32)

    def __call__(self, sentences):
        att = sentences > 0                                        # (B, L) bool, 0 = pad
        return (self.table0[sentences], self.table1[sentences]), att


class DepProbe:
    def __init__(self, emb_model, dep_dim, dep_rels, key):
        self._root_label = dep_rels.index('root')
        self._emb = emb_model
        k_arc, k_lbl = jax.random.split(key)
        # torch.nn.Linear(in, out, bias=False).weight has shape (out, in)
        self.w_arc = (jax.random.normal(k_arc, (dep_dim, emb_model.emb_dim), jnp.float32)
                      * (1.0 / np.sqrt(emb_model.emb_dim)))
        self.w_lbl = (jax.random.normal(k_lbl, (len(dep_rels), emb_model.emb_dim), jnp.float32)
                      * (1.0 / np.sqrt(emb_model.emb_dim)))

    def forward(self, sentences, decode=True):
        (emb0, emb1), att = self._emb(sentences)
        dep_embeddings, distances, lbl_logits = depprobe_forward(
            emb0, emb1, att, self.w_arc, self.w_lbl)
        results = {'dependency_embeddings': dep_embeddings,
                   'distances': distances,
                   'label_logits': lbl_logits}
        if decode:
            roots, labels = get_labels(lbl_logits, self._root_label)
            graphs = to_graph(roots, distances, att)
            results['graphs'] = graphs
            results['labels'] = labels
        return results


# ------------------------------------------------------------------ main

if __name__ == "__main__":
    B, L, EMB_DIM, DEP_DIM, VOCAB = 2, 8, 32, 16, 50
    dep_rels = ['acl', 'advmod', 'amod', 'root', 'nsubj', 'obj', 'det', 'punct']

    key = jax.random.PRNGKey(0)
    k_emb, k_probe, k_tok = jax.random.split(key, 3)

    emb_model = SyntheticEmbModel(k_emb, VOCAB, EMB_DIM)
    probe = DepProbe(emb_model, DEP_DIM, dep_rels, k_probe)

    # token ids; last two positions of sentence 0 are padding
    sentences = jax.random.randint(k_tok, (B, L), 1, VOCAB, dtype=jnp.int32)
    sentences = sentences.at[0, L - 2:].set(0)

    results = probe.forward(sentences, decode=True)
    jax.block_until_ready(results['dependency_embeddings'])
    jax.block_until_ready(results['distances'])
    jax.block_until_ready(results['label_logits'])
    jax.block_until_ready(results['labels'])

    # lightweight reference check (plain JAX).  Tolerances are sized to absorb MXU matmul
    # precision differences and the Gram-identity vs diff-square-sum fp-op-order change;
    # structural errors (wrong transpose/mask/indexing) would be O(1) and still fail.
    (emb0, emb1), att = emb_model(sentences)
    dep_ref = jnp.einsum('ble,de->bld', emb0, probe.w_arc)
    diff = dep_ref[:, :, None, :] - dep_ref[:, None, :, :]
    dist_ref = jnp.sum(diff * diff, axis=-1)
    lbl_ref = jnp.where(att[..., None],
                        jnp.einsum('ble,ne->bln', emb1, probe.w_lbl), -jnp.inf)

    dep_out = np.asarray(results['dependency_embeddings'])
    dist_out = np.asarray(results['distances'])
    lbl_out = np.asarray(results['label_logits'])

    assert dep_out.shape == (B, L, DEP_DIM)
    assert dist_out.shape == (B, L, L)
    assert lbl_out.shape == (B, L, len(dep_rels))
    assert np.allclose(dep_out, np.asarray(dep_ref), rtol=2e-2, atol=2e-2)
    assert np.allclose(dist_out, np.asarray(dist_ref), rtol=2e-2, atol=1e-1)
    assert np.allclose(lbl_out, np.asarray(lbl_ref), rtol=2e-2, atol=2e-2)   # -inf pos must match
    assert np.all(np.abs(np.diagonal(dist_out, axis1=1, axis2=2)) < 1e-5)    # exact-ish 0 diag

    print("KERNEL_OK")
</pallas_src>

<mosaic_0001>
module attributes {stable_mosaic.version = 11 : i64} {
  func.func @_depprobe_kernel(%arg0: i32, %arg1: memref<16x32xf32, #tpu.memory_space<vmem>>, %arg2: memref<16x32xf32, #tpu.memory_space<vmem>>, %arg3: memref<16x1xi32, #tpu.memory_space<vmem>>, %arg4: memref<32x128xf32, #tpu.memory_space<vmem>>, %arg5: memref<32x128xf32, #tpu.memory_space<vmem>>, %arg6: memref<16x128xf32, #tpu.memory_space<vmem>>, %arg7: memref<2x8x8xf32, #tpu.memory_space<vmem>>, %arg8: memref<16x128xf32, #tpu.memory_space<vmem>>) attributes {dimension_semantics = [#tpu.dimension_semantics<arbitrary>], iteration_bounds = array<i64: 1>, scalar_prefetch = 0 : i64, scratch_operands = 0 : i64, tpu.core_type = #tpu.core_type<tc>, window_params = [{pipeline_mode = #tpu.pipeline_mode<synchronous>, transform_indices = @transform_0, window_bounds = array<i64: 16, 32>}, {pipeline_mode = #tpu.pipeline_mode<synchronous>, transform_indices = @transform_1, window_bounds = array<i64: 16, 32>}, {pipeline_mode = #tpu.pipeline_mode<synchronous>, transform_indices = @transform_2, window_bounds = array<i64: 16, 1>}, {pipeline_mode = #tpu.pipeline_mode<synchronous>, transform_indices = @transform_3, window_bounds = array<i64: 32, 128>}, {pipeline_mode = #tpu.pipeline_mode<synchronous>, transform_indices = @transform_4, window_bounds = array<i64: 32, 128>}, {pipeline_mode = #tpu.pipeline_mode<synchronous>, transform_indices = @transform_5, window_bounds = array<i64: 16, 128>}, {pipeline_mode = #tpu.pipeline_mode<synchronous>, transform_indices = @transform_6, window_bounds = array<i64: 2, 8, 8>}, {pipeline_mode = #tpu.pipeline_mode<synchronous>, transform_indices = @transform_7, window_bounds = array<i64: 16, 128>}]} {
    %c0 = arith.constant 0 : index
    %c0_0 = arith.constant 0 : index
    %0 = vector.load %arg1[%c0, %c0_0] : memref<16x32xf32, #tpu.memory_space<vmem>>, vector<16x32xf32>
    %c0_1 = arith.constant 0 : index
    %c0_2 = arith.constant 0 : index
    %1 = vector.load %arg4[%c0_1, %c0_2] : memref<32x128xf32, #tpu.memory_space<vmem>>, vector<32x128xf32>
    %cst = arith.constant dense<0.000000e+00> : vector<16x128xf32>
    %2 = tpu.matmul %0, %1, %cst {dimension_numbers = #tpu.dot_dimension_numbers<[1], [0], [0], [1], [0, 0, 1, 1], [], []>} : vector<16x32xf32>, vector<32x128xf32>, vector<16x128xf32> -> vector<16x128xf32>
    %c0_3 = arith.constant 0 : index
    %c0_4 = arith.constant 0 : index
    %3 = vector.load %arg6[%c0_3, %c0_4] : memref<16x128xf32, #tpu.memory_space<vmem>>, vector<16x128xf32>
    tpu.vector_store %arg6[%c0_3, %c0_4], %2 {strides = array<i32>} : memref<16x128xf32, #tpu.memory_space<vmem>>, vector<16x128xf32>,
    %c0_5 = arith.constant 0 : index
    %c0_6 = arith.constant 0 : index
    %4 = vector.load %arg2[%c0_5, %c0_6] : memref<16x32xf32, #tpu.memory_space<vmem>>, vector<16x32xf32>
    %c0_7 = arith.constant 0 : index
    %c0_8 = arith.constant 0 : index
    %5 = vector.load %arg5[%c0_7, %c0_8] : memref<32x128xf32, #tpu.memory_space<vmem>>, vector<32x128xf32>
    %cst_9 = arith.constant dense<0.000000e+00> : vector<16x128xf32>
    %6 = tpu.matmul %4, %5, %cst_9 {dimension_numbers = #tpu.dot_dimension_numbers<[1], [0], [0], [1], [0, 0, 1, 1], [], []>} : vector<16x32xf32>, vector<32x128xf32>, vector<16x128xf32> -> vector<16x128xf32>
    %c0_10 = arith.constant 0 : index
    %c0_11 = arith.constant 0 : index
    %7 = vector.load %arg3[%c0_10, %c0_11] : memref<16x1xi32, #tpu.memory_space<vmem>>, vector<16x1xi32>
    %c0_i32 = arith.constant 0 : i32
    %8 = vector.broadcast %c0_i32 : i32 to vector<16x1xi32>
    %9 = arith.cmpi ne, %7, %8 : vector<16x1xi32>
    %cst_12 = arith.constant 0xFF800000 : f32
    %10 = vector.shape_cast %9 : vector<16x1xi1> to vector<16x1xi1>
    %11 = vector.broadcast %10 : vector<16x1xi1> to vector<16x128xi1>
    %12 = vector.broadcast %cst_12 : f32 to vector<16x128xf32>
    %13 = arith.select %11, %6, %12 : vector<16x128xi1>, vector<16x128xf32>
    %c0_13 = arith.constant 0 : index
    %c0_14 = arith.constant 0 : index
    %14 = vector.load %arg8[%c0_13, %c0_14] : memref<16x128xf32, #tpu.memory_space<vmem>>, vector<16x128xf32>
    tpu.vector_store %arg8[%c0_13, %c0_14], %13 {strides = array<i32>} : memref<16x128xf32, #tpu.memory_space<vmem>>, vector<16x128xf32>,
    %15 = tpu.iota {dimensions = array<i32: 0>} : vector<8x8xi32>
    %16 = tpu.iota {dimensions = array<i32: 1>} : vector<8x8xi32>
    %17 = arith.cmpi eq, %15, %16 : vector<8x8xi32>
    %18 = vector.extract_strided_slice %2 {offsets = [0, 0], sizes = [8, 128], strides = [1, 1]} : vector<16x128xf32> to vector<8x128xf32>
    %cst_15 = arith.constant dense<0.000000e+00> : vector<8x8xf32>
    %19 = tpu.matmul %18, %18, %cst_15 {dimension_numbers = #tpu.dot_dimension_numbers<[1], [1], [0], [0], [0, 0, 1, 0], [], []>} : vector<8x128xf32>, vector<8x128xf32>, vector<8x8xf32> -> vector<8x8xf32>
    %cst_16 = arith.constant 0.000000e+00 : f32
    %20 = vector.broadcast %cst_16 : f32 to vector<8x8xf32>
    %21 = arith.select %17, %19, %20 : vector<8x8xi1>, vector<8x8xf32>
    %cst_17 = arith.constant dense<0.000000e+00> : vector<8xf32>
    %22 = vector.multi_reduction <add>, %21, %cst_17 [1] : vector<8x8xf32> to vector<8xf32>
    %23 = vector.shape_cast %22 : vector<8xf32> to vector<8x1xf32>
    %cst_18 = arith.constant dense<0.000000e+00> : vector<8xf32>
    %24 = vector.multi_reduction <add>, %21, %cst_18 [0] : vector<8x8xf32> to vector<8xf32>
    %25 = vector.shape_cast %24 : vector<8xf32> to vector<1x8xf32>
    %26 = vector.broadcast %23 : vector<8x1xf32> to vector<8x8xf32>
    %27 = vector.broadcast %25 : vector<1x8xf32> to vector<8x8xf32>
    %28 = arith.addf %26, %27 : vector<8x8xf32>
    %cst_19 = arith.constant 2.000000e+00 : f32
    %29 = vector.broadcast %cst_19 : f32 to vector<8x8xf32>
    %30 = arith.mulf %29, %19 : vector<8x8xf32>
    %31 = arith.subf %28, %30 : vector<8x8xf32>
    %cst_20 = arith.constant 0.000000e+00 : f32
    %32 = vector.broadcast %cst_20 : f32 to vector<8x8xf32>
    %33 = arith.maximumf %31, %32 : vector<8x8xf32>
    %c0_21 = arith.constant 0 : index
    %c0_22 = arith.constant 0 : index
    %c0_23 = arith.constant 0 : index
    %34 = vector.load %arg7[%c0_21, %c0_22, %c0_23] : memref<2x8x8xf32, #tpu.memory_space<vmem>>, vector<1x8x8xf32>
    %35 = vector.shape_cast %34 : vector<1x8x8xf32> to vector<8x8xf32>
    %36 = vector.shape_cast %33 : vector<8x8xf32> to vector<1x8x8xf32>
    tpu.vector_store %arg7[%c0_21, %c0_22, %c0_23], %36 {strides = array<i32>} : memref<2x8x8xf32, #tpu.memory_space<vmem>>, vector<1x8x8xf32>,
    %37 = vector.extract_strided_slice %2 {offsets = [8, 0], sizes = [8, 128], strides = [1, 1]} : vector<16x128xf32> to vector<8x128xf32>
    %cst_24 = arith.constant dense<0.000000e+00> : vector<8x8xf32>
    %38 = tpu.matmul %37, %37, %cst_24 {dimension_numbers = #tpu.dot_dimension_numbers<[1], [1], [0], [0], [0, 0, 1, 0], [], []>} : vector<8x128xf32>, vector<8x128xf32>, vector<8x8xf32> -> vector<8x8xf32>
    %cst_25 = arith.constant 0.000000e+00 : f32
    %39 = vector.broadcast %cst_25 : f32 to vector<8x8xf32>
    %40 = arith.select %17, %38, %39 : vector<8x8xi1>, vector<8x8xf32>
    %cst_26 = arith.constant dense<0.000000e+00> : vector<8xf32>
    %41 = vector.multi_reduction <add>, %40, %cst_26 [1] : vector<8x8xf32> to vector<8xf32>
    %42 = vector.shape_cast %41 : vector<8xf32> to vector<8x1xf32>
    %cst_27 = arith.constant dense<0.000000e+00> : vector<8xf32>
    %43 = vector.multi_reduction <add>, %40, %cst_27 [0] : vector<8x8xf32> to vector<8xf32>
    %44 = vector.shape_cast %43 : vector<8xf32> to vector<1x8xf32>
    %45 = vector.broadcast %42 : vector<8x1xf32> to vector<8x8xf32>
    %46 = vector.broadcast %44 : vector<1x8xf32> to vector<8x8xf32>
    %47 = arith.addf %45, %46 : vector<8x8xf32>
    %cst_28 = arith.constant 2.000000e+00 : f32
    %48 = vector.broadcast %cst_28 : f32 to vector<8x8xf32>
    %49 = arith.mulf %48, %38 : vector<8x8xf32>
    %50 = arith.subf %47, %49 : vector<8x8xf32>
    %cst_29 = arith.constant 0.000000e+00 : f32
    %51 = vector.broadcast %cst_29 : f32 to vector<8x8xf32>
    %52 = arith.maximumf %50, %51 : vector<8x8xf32>
    %c1 = arith.constant 1 : index
    %c0_30 = arith.constant 0 : index
    %c0_31 = arith.constant 0 : index
    %53 = vector.load %arg7[%c1, %c0_30, %c0_31] : memref<2x8x8xf32, #tpu.memory_space<vmem>>, vector<1x8x8xf32>
    %54 = vector.shape_cast %53 : vector<1x8x8xf32> to vector<8x8xf32>
    %55 = vector.shape_cast %52 : vector<8x8xf32> to vector<1x8x8xf32>
    tpu.vector_store %arg7[%c1, %c0_30, %c0_31], %55 {strides = array<i32>} : memref<2x8x8xf32, #tpu.memory_space<vmem>>, vector<1x8x8xf32>,
    return
  }
  func.func @transform_0(%arg0: i32) -> (i32, i32) {
    %c0_i32 = arith.constant 0 : i32
    %c0_i32_0 = arith.constant 0 : i32
    %c0_i32_1 = arith.constant 0 : i32
    return %c0_i32, %c0_i32_0 : i32, i32
  }
  func.func @transform_1(%arg0: i32) -> (i32, i32) {
    %c0_i32 = arith.constant 0 : i32
    %c0_i32_0 = arith.constant 0 : i32
    %c0_i32_1 = arith.constant 0 : i32
    return %c0_i32, %c0_i32_0 : i32, i32
  }
  func.func @transform_2(%arg0: i32) -> (i32, i32) {
    %c0_i32 = arith.constant 0 : i32
    %c0_i32_0 = arith.constant 0 : i32
    %c0_i32_1 = arith.constant 0 : i32
    return %c0_i32, %c0_i32_0 : i32, i32
  }
  func.func @transform_3(%arg0: i32) -> (i32, i32) {
    %c0_i32 = arith.constant 0 : i32
    %c0_i32_0 = arith.constant 0 : i32
    %c0_i32_1 = arith.constant 0 : i32
    return %c0_i32, %c0_i32_0 : i32, i32
  }
  func.func @transform_4(%arg0: i32) -> (i32, i32) {
    %c0_i32 = arith.constant 0 : i32
    %c0_i32_0 = arith.constant 0 : i32
    %c0_i32_1 = arith.constant 0 : i32
    return %c0_i32, %c0_i32_0 : i32, i32
  }
  func.func @transform_5(%arg0: i32) -> (i32, i32) {
    %c0_i32 = arith.constant 0 : i32
    %c0_i32_0 = arith.constant 0 : i32
    %c0_i32_1 = arith.constant 0 : i32
    return %c0_i32, %c0_i32_0 : i32, i32
  }
  func.func @transform_6(%arg0: i32) -> (i32, i32, i32) {
    %c0_i32 = arith.constant 0 : i32
    %c0_i32_0 = arith.constant 0 : i32
    %c0_i32_1 = arith.constant 0 : i32
    %c0_i32_2 = arith.constant 0 : i32
    return %c0_i32, %c0_i32_0, %c0_i32_1 : i32, i32, i32
  }
  func.func @transform_7(%arg0: i32) -> (i32, i32) {
    %c0_i32 = arith.constant 0 : i32
    %c0_i32_0 = arith.constant 0 : i32
    %c0_i32_1 = arith.constant 0 : i32
    return %c0_i32, %c0_i32_0 : i32, i32
  }
}

</mosaic_0001>

<llo_original>
// kernel: tpu_custom_call.1
$region0: #{tpu_custom_call.1}
  #allocation0 [shape = 'u32[]', space=smem, size = 0x4, offset = 0x4, fixed_abs, tag = 'smem constant byte address 0x4 - core index']
  #allocation1 [shape = 'u32[144,128]{1,0:T(1,128)}', space=vmem, size = 0x12000, scoped, tag = 'internal scratch']
  %s0 = inlined_call_operand.hbm [shape: f32[16,32], index: 0, kind: input, shape index: {}]
  %s1 = inlined_call_operand.hbm [shape: f32[16,32], index: 1, kind: input, shape index: {}]
  %s2 = inlined_call_operand.vmem [shape: s32[16,1], index: 2, kind: input, shape index: {}]
  %s3 = inlined_call_operand.hbm [shape: f32[32,128], index: 3, kind: input, shape index: {}]
  %s4 = inlined_call_operand.vmem [shape: f32[32,128], index: 4, kind: input, shape index: {}]
  %s5 = inlined_call_operand.hbm [shape: f32[16,128], index: 5, kind: output, shape index: {0}]
  %s6 = inlined_call_operand.hbm [shape: f32[2,8,8], index: 6, kind: output, shape index: {1}]
  %s7 = inlined_call_operand.hbm [shape: f32[16,128], index: 7, kind: output, shape index: {2}]
  %8 = xla_tuple %s5, %s6, %s7
  %s9 = sld [smem:[#allocation0]]
  $region58: #{tpu_custom_call.1} parent=0
    _
  %s11 = ssub.s32 1, %s9
  %s12 = scalar_select 0, %s11, %s9
  $region1: #{tpu_custom_call.1} parent=0
    #allocation2 [shape = 'u8[8192]{0}', space=vmem, size = 0x2000, scoped, tag = 'input window, operand 0, single buffered']
    #allocation3 [shape = 's32[1]{0}', space=sflag, size = 0x4, scoped, tag = 'scoped memory for tpu_custom_call.1']
    #allocation4 [shape = 's32[1]{0}', space=sflag, size = 0x4, scoped, tag = 'scoped memory for tpu_custom_call.1']
    #allocation5 [shape = 'u8[8192]{0}', space=vmem, size = 0x2000, scoped, tag = 'input window, operand 1, single buffered']
    #allocation6 [shape = 's32[1]{0}', space=sflag, size = 0x4, scoped, tag = 'scoped memory for tpu_custom_call.1']
    #allocation7 [shape = 'u8[16384]{0}', space=vmem, size = 0x4000, scoped, tag = 'input window, operand 3, single buffered']
    #allocation8 [shape = 'u8[8192]{0}', space=vmem, size = 0x2000, scoped, tag = 'output window, operand 0, single buffered']
    #allocation9 [shape = 'u8[8192]{0}', space=vmem, size = 0x2000, scoped, tag = 'output window, operand 1, single buffered']
    #allocation10 [shape = 's32[1]{0}', space=sflag, size = 0x4, scoped, tag = 'scoped memory for tpu_custom_call.1']
    #allocation11 [shape = 'u8[8192]{0}', space=vmem, size = 0x2000, scoped, tag = 'output window, operand 2, single buffered']
    %13 = vsyncpa [#allocation3], 0
    %14 = vsyncpa [#allocation6], 0
    %15 = vsyncpa [#allocation4], 0
    %16 = vsyncpa [#allocation10], 0
    // Predicated region
    $region2: #{tpu_custom_call.1} parent=1 // pred_check
      _
    $region3: #{tpu_custom_call.1} parent=1 // pred_check_branch
      %18 = sbr.rel (0) target = $region5
    $region4: #{tpu_custom_call.1} parent=1 // pred_region
      %s20 = ssub.s32 256, 256
      %21 = vsyncadd [#allocation3], %s20
      %s22 = sshll.u32 [#allocation2], 4
      %s23 = int_to_ptr.vmem [resolvable:$true] %s22
      %28 = dma.hbm_to_vmem [thread:$0]  %s0, 256, %s23, [#allocation3], 128, 128, 8
    $region5: #{tpu_custom_call.1} parent=1 // pred_fallthru
      _
    // Predicated region
    $region6: #{tpu_custom_call.1} parent=1 // pred_check
      _
    $region7: #{tpu_custom_call.1} parent=1 // pred_check_branch
      %30 = sbr.rel (0) target = $region9
    $region8: #{tpu_custom_call.1} parent=1 // pred_region
      %s32 = ssub.s32 256, 256
      %33 = vsyncadd [#allocation6], %s32
      %s34 = sshll.u32 [#allocation5], 4
      %s35 = int_to_ptr.vmem [resolvable:$true] %s34
      %40 = dma.hbm_to_vmem [thread:$0]  %s1, 256, %s35, [#allocation6], 128, 128, 8
    $region9: #{tpu_custom_call.1} parent=1 // pred_fallthru
      _
    // Predicated region
    $region10: #{tpu_custom_call.1} parent=1 // pred_check
      _
    $region11: #{tpu_custom_call.1} parent=1 // pred_check_branch
      %42 = sbr.rel (0) target = $region13
    $region12: #{tpu_custom_call.1} parent=1 // pred_region
      _
    $region13: #{tpu_custom_call.1} parent=1 // pred_fallthru
      _
    // Predicated region
    $region14: #{tpu_custom_call.1} parent=1 // pred_check
      _
    $region15: #{tpu_custom_call.1} parent=1 // pred_check_branch
      %44 = sbr.rel (0) target = $region17
    $region16: #{tpu_custom_call.1} parent=1 // pred_region
      %s46 = ssub.s32 512, 512
      %47 = vsyncadd [#allocation6], %s46
      %s48 = sshll.u32 [#allocation7], 4
      %s49 = int_to_ptr.vmem [resolvable:$true] %s48
      %54 = dma.hbm_to_vmem [thread:$0]  %s3, 512, %s49, [#allocation6], 128, 128, 8
    $region17: #{tpu_custom_call.1} parent=1 // pred_fallthru
      _
    // Predicated region
    $region18: #{tpu_custom_call.1} parent=1 // pred_check
      _
    $region19: #{tpu_custom_call.1} parent=1 // pred_check_branch
      %56 = sbr.rel (0) target = $region21
    $region20: #{tpu_custom_call.1} parent=1 // pred_region
      _
    $region21: #{tpu_custom_call.1} parent=1 // pred_fallthru
      _
    // Predicated region
    $region22: #{tpu_custom_call.1} parent=1 // pred_check
      _
    $region23: #{tpu_custom_call.1} parent=1 // pred_check_branch
      %58 = sbr.rel (0) target = $region25
    $region24: #{tpu_custom_call.1} parent=1 // pred_region
      %59 = dma.done [#allocation3], 256
    $region25: #{tpu_custom_call.1} parent=1 // pred_fallthru
      _
    // Predicated region
    $region26: #{tpu_custom_call.1} parent=1 // pred_check
      _
    $region27: #{tpu_custom_call.1} parent=1 // pred_check_branch
      %61 = sbr.rel (0) target = $region29
    $region28: #{tpu_custom_call.1} parent=1 // pred_region
      %62 = dma.done [#allocation6], 256
    $region29: #{tpu_custom_call.1} parent=1 // pred_fallthru
      _
    // Predicated region
    $region30: #{tpu_custom_call.1} parent=1 // pred_check
      _
    $region31: #{tpu_custom_call.1} parent=1 // pred_check_branch
      %64 = sbr.rel (0) target = $region33
    $region32: #{tpu_custom_call.1} parent=1 // pred_region
      %65 = dma.done [#allocation6], 512
    $region33: #{tpu_custom_call.1} parent=1 // pred_fallthru
      _
    %v66 = vld [vmem:[#allocation2] sm:$0xff]
    %v67 = vld [vmem:[#allocation2 + $0x8] sm:$0xff]
    %v68 = vld [vmem:[#allocation7] sm:$0xff]
    %v69 = vld [vmem:[#allocation7 + $0x8] sm:$0xff]
    %v70 = vld [vmem:[#allocation7 + $0x10] sm:$0xff]
    %v71 = vld [vmem:[#allocation7 + $0x18] sm:$0xff]
    %vm72 = vcmask 261120
    %v74 = vsel %vm72, %v66, 0
    %v77 = vsel %vm72, %v67, 0
    %79 = vmatprep.subr.mxu0 0.0
    %80 = vmatpush1.msra.mxu0 %v68
    %81 = vmatprep.subr.mxu0 0.0
    %82 = vmatpush1.msra.mxu0 %v69
    %83 = vmatprep.subr.mxu0 0.0
    %84 = vmatpush1.msra.mxu0 %v70
    %85 = vmatprep.subr.mxu0 0.0
    %86 = vmatpush1.msra.mxu0 %v71
    %87 = vmatprep.subr.mxu0 0.0
    %88 = vmatpush1.msra.mxu0 0.0
    %89 = vmatprep.subr.mxu0 0.0
    %90 = vmatpush1.msra.mxu0 0.0
    %91 = vmatprep.subr.mxu0 0.0
    %92 = vmatpush1.msra.mxu0 0.0
    %93 = vmatprep.subr.mxu0 0.0
    %94 = vmatpush1.msra.mxu0 0.0
    %95 = vmatprep.subr.mxu0 0.0
    %96 = vmatpush1.msra.mxu0 0.0
    %97 = vmatprep.subr.mxu0 0.0
    %98 = vmatpush1.msra.mxu0 0.0
    %99 = vmatprep.subr.mxu0 0.0
    %100 = vmatpush1.msra.mxu0 0.0
    %101 = vmatprep.subr.mxu0 0.0
    %102 = vmatpush1.msra.mxu0 0.0
    %103 = vmatprep.subr.mxu0 0.0
    %104 = vmatpush1.msra.mxu0 0.0
    %105 = vmatprep.subr.mxu0 0.0
    %106 = vmatpush1.msra.mxu0 0.0
    %107 = vmatprep.subr.mxu0 0.0
    %108 = vmatpush1.msra.mxu0 0.0
    %109 = vmatprep.subr.mxu0 0.0
    %110 = vmatpush1.msra.mxu0 0.0
    %111 = vmatprep.subr.mxu0 0.0
    %112 = vmatpush1.msra.mxu0 0.0
    %113 = vmatprep.subr.mxu0 0.0
    %114 = vmatpush1.msra.mxu0 0.0
    %115 = vmatprep.subr.mxu0 0.0
    %116 = vmatpush1.msra.mxu0 0.0
    %117 = vmatprep.subr.mxu0 0.0
    %118 = vmatpush1.msra.mxu0 0.0
    %119 = vmatprep.subr.mxu0 0.0
    %120 = vmatpush1.msra.mxu0 0.0
    %121 = vmatprep.subr.mxu0 0.0
    %122 = vmatpush1.msra.mxu0 0.0
    %123 = vmatprep.subr.mxu0 0.0
    %124 = vmatpush1.msra.mxu0 0.0
    %125 = vmatprep.subr.mxu0 0.0
    %126 = vmatpush1.msra.mxu0 0.0
    %127 = vmatprep.subr.mxu0 0.0
    %128 = vmatpush1.msra.mxu0 0.0
    %129 = vmatprep.subr.mxu0 0.0
    %130 = vmatpush1.msra.mxu0 0.0
    %131 = vmatprep.subr.mxu0 0.0
    %132 = vmatpush1.msra.mxu0 0.0
    %133 = vmatprep.subr.mxu0 0.0
    %134 = vmatpush1.msra.mxu0 0.0
    %135 = vmatprep.subr.mxu0 0.0
    %136 = vmatpush1.msra.mxu0 0.0
    %137 = vmatprep.subr.mxu0 0.0
    %138 = vmatpush1.msra.mxu0 0.0
    %139 = vmatprep.subr.mxu0 0.0
    %140 = vmatpush1.msra.mxu0 0.0
    %141 = vmatprep.subr.mxu0 0.0
    %142 = vmatpush1.msra.mxu0 0.0
    %143 = vmatprep.mubr.f32.mxu0 0.0
    %144 = vmatmul.mubr.f32.gmra.mrb[0].mxu0 %v74
    %v145 = vpop.f32.mrb[0].mxu0
    %v146 = vadd.f32 0.0, %v145
    %v147 = vpop.f32.mrb[0].mxu0
    %148 = vmatprep.mubr.f32.mxu0 0.0
    %149 = vmatmul.mubr.f32.gmra.mrb[0].mxu0 %v77
    %v150 = vpop.f32.mrb[0].mxu0
    %v151 = vadd.f32 0.0, %v150
    %v152 = vpop.f32.mrb[0].mxu0
    %153 = vdwg.mxu0
    %154 = vst [vmem:[#allocation8] sm:$0xff] %v146
    %155 = vst [vmem:[#allocation8 + $0x8] sm:$0xff] %v151
    %v156 = vld [vmem:[#allocation5] sm:$0xff]
    %v157 = vld [vmem:[#allocation5 + $0x8] sm:$0xff]
    %v158 = vld [vmem:[%s4] sm:$0xff]
    %v159 = vld [vmem:[%s4 + $0x8] sm:$0xff]
    %v160 = vld [vmem:[%s4 + $0x10] sm:$0xff]
    %v161 = vld [vmem:[%s4 + $0x18] sm:$0xff]
    %v163 = vsel %vm72, %v156, 0
    %v166 = vsel %vm72, %v157, 0
    %168 = vmatprep.subr.mxu0 0.0
    %169 = vmatpush1.msra.mxu0 %v158
    %170 = vmatprep.subr.mxu0 0.0
    %171 = vmatpush1.msra.mxu0 %v159
    %172 = vmatprep.subr.mxu0 0.0
    %173 = vmatpush1.msra.mxu0 %v160
    %174 = vmatprep.subr.mxu0 0.0
    %175 = vmatpush1.msra.mxu0 %v161
    %176 = vmatprep.subr.mxu0 0.0
    %177 = vmatpush1.msra.mxu0 0.0
    %178 = vmatprep.subr.mxu0 0.0
    %179 = vmatpush1.msra.mxu0 0.0
    %180 = vmatprep.subr.mxu0 0.0
    %181 = vmatpush1.msra.mxu0 0.0
    %182 = vmatprep.subr.mxu0 0.0
    %183 = vmatpush1.msra.mxu0 0.0
    %184 = vmatprep.subr.mxu0 0.0
    %185 = vmatpush1.msra.mxu0 0.0
    %186 = vmatprep.subr.mxu0 0.0
    %187 = vmatpush1.msra.mxu0 0.0
    %188 = vmatprep.subr.mxu0 0.0
    %189 = vmatpush1.msra.mxu0 0.0
    %190 = vmatprep.subr.mxu0 0.0
    %191 = vmatpush1.msra.mxu0 0.0
    %192 = vmatprep.subr.mxu0 0.0
    %193 = vmatpush1.msra.mxu0 0.0
    %194 = vmatprep.subr.mxu0 0.0
    %195 = vmatpush1.msra.mxu0 0.0
    %196 = vmatprep.subr.mxu0 0.0
    %197 = vmatpush1.msra.mxu0 0.0
    %198 = vmatprep.subr.mxu0 0.0
    %199 = vmatpush1.msra.mxu0 0.0
    %200 = vmatprep.subr.mxu0 0.0
    %201 = vmatpush1.msra.mxu0 0.0
    %202 = vmatprep.subr.mxu0 0.0
    %203 = vmatpush1.msra.mxu0 0.0
    %204 = vmatprep.subr.mxu0 0.0
    %205 = vmatpush1.msra.mxu0 0.0
    %206 = vmatprep.subr.mxu0 0.0
    %207 = vmatpush1.msra.mxu0 0.0
    %208 = vmatprep.subr.mxu0 0.0
    %209 = vmatpush1.msra.mxu0 0.0
    %210 = vmatprep.subr.mxu0 0.0
    %211 = vmatpush1.msra.mxu0 0.0
    %212 = vmatprep.subr.mxu0 0.0
    %213 = vmatpush1.msra.mxu0 0.0
    %214 = vmatprep.subr.mxu0 0.0
    %215 = vmatpush1.msra.mxu0 0.0
    %216 = vmatprep.subr.mxu0 0.0
    %217 = vmatpush1.msra.mxu0 0.0
    %218 = vmatprep.subr.mxu0 0.0
    %219 = vmatpush1.msra.mxu0 0.0
    %220 = vmatprep.subr.mxu0 0.0
    %221 = vmatpush1.msra.mxu0 0.0
    %222 = vmatprep.subr.mxu0 0.0
    %223 = vmatpush1.msra.mxu0 0.0
    %224 = vmatprep.subr.mxu0 0.0
    %225 = vmatpush1.msra.mxu0 0.0
    %226 = vmatprep.subr.mxu0 0.0
    %227 = vmatpush1.msra.mxu0 0.0
    %228 = vmatprep.subr.mxu0 0.0
    %229 = vmatpush1.msra.mxu0 0.0
    %230 = vmatprep.subr.mxu0 0.0
    %231 = vmatpush1.msra.mxu0 0.0
    %232 = vmatprep.mubr.f32.mxu0 0.0
    %233 = vmatmul.mubr.f32.gmra.mrb[0].mxu0 %v163
    %v234 = vpop.f32.mrb[0].mxu0
    %v235 = vadd.f32 0.0, %v234
    %v236 = vpop.f32.mrb[0].mxu0
    %237 = vmatprep.mubr.f32.mxu0 0.0
    %238 = vmatmul.mubr.f32.gmra.mrb[0].mxu0 %v166
    %v239 = vpop.f32.mrb[0].mxu0
    %v240 = vadd.f32 0.0, %v239
    %v241 = vpop.f32.mrb[0].mxu0
    %242 = vdwg.mxu0
    %v243 = vld [vmem:[%s2] sm:$0xff]
    %v244 = vld [vmem:[%s2 + $0x8] sm:$0xff]
    %vm245 = vcmp.ne.s32.totalorder %v243, 0
    %vm246 = vcmp.ne.s32.totalorder %v244, 0
    %v247 = vsel %vm245, 1, 0
    %v248 = vsel %vm246, 1, 0
    %249 = vset.pattern.permute.xlu0 0
    %250 = vperm.xlu0 %249, %v247
    %v251 = vpop.permute.xlu0 %250
    %252 = vset.pattern.permute.xlu0 0
    %253 = vperm.xlu0 %252, %v248
    %v254 = vpop.permute.xlu0 %253
    %vm255 = vcmp.eq.s32.totalorder %v251, 1
    %vm256 = vcmp.eq.s32.totalorder %v254, 1
    %v257 = vsel %vm255, %v235, -inf
    %v258 = vsel %vm256, %v240, -inf
    %259 = vst [vmem:[#allocation11] sm:$0xff] %v257
    %260 = vst [vmem:[#allocation11 + $0x8] sm:$0xff] %v258
    %v261 = vlaneseq
    %v262 = vshrl.u32 %v261, 7
    %v263 = vlaneseq
    %v264 = vand.u32 %v263, 127
    %vm265 = vcmp.eq.s32.totalorder %v262, %v264
    %266 = vmatprep.subr.mxu0 0.0
    %267 = vmatpush1.xpose.msra.mxu0 %v146
    %268 = vmatprep.subr.mxu0 0.0
    %269 = vmatpush1.xpose.msra.mxu0 0.0
    %270 = vmatprep.subr.mxu0 0.0
    %271 = vmatpush1.xpose.msra.mxu0 0.0
    %272 = vmatprep.subr.mxu0 0.0
    %273 = vmatpush1.xpose.msra.mxu0 0.0
    %274 = vmatprep.subr.mxu0 0.0
    %275 = vmatpush1.xpose.msra.mxu0 0.0
    %276 = vmatprep.subr.mxu0 0.0
    %277 = vmatpush1.xpose.msra.mxu0 0.0
    %278 = vmatprep.subr.mxu0 0.0
    %279 = vmatpush1.xpose.msra.mxu0 0.0
    %280 = vmatprep.subr.mxu0 0.0
    %281 = vmatpush1.xpose.msra.mxu0 0.0
    %282 = vmatprep.subr.mxu0 0.0
    %283 = vmatpush1.xpose.msra.mxu0 0.0
    %284 = vmatprep.subr.mxu0 0.0
    %285 = vmatpush1.xpose.msra.mxu0 0.0
    %286 = vmatprep.subr.mxu0 0.0
    %287 = vmatpush1.xpose.msra.mxu0 0.0
    %288 = vmatprep.subr.mxu0 0.0
    %289 = vmatpush1.xpose.msra.mxu0 0.0
    %290 = vmatprep.subr.mxu0 0.0
    %291 = vmatpush1.xpose.msra.mxu0 0.0
    %292 = vmatprep.subr.mxu0 0.0
    %293 = vmatpush1.xpose.msra.mxu0 0.0
    %294 = vmatprep.subr.mxu0 0.0
    %295 = vmatpush1.xpose.msra.mxu0 0.0
    %296 = vmatprep.subr.mxu0 0.0
    %297 = vmatpush1.xpose.msra.mxu0 0.0
    %298 = vmatprep.subr.mxu0 0.0
    %299 = vmatpush1.xpose.msra.mxu0 0.0
    %300 = vmatprep.subr.mxu0 0.0
    %301 = vmatpush1.xpose.msra.mxu0 0.0
    %302 = vmatprep.subr.mxu0 0.0
    %303 = vmatpush1.xpose.msra.mxu0 0.0
    %304 = vmatprep.subr.mxu0 0.0
    %305 = vmatpush1.xpose.msra.mxu0 0.0
    %306 = vmatprep.subr.mxu0 0.0
    %307 = vmatpush1.xpose.msra.mxu0 0.0
    %308 = vmatprep.subr.mxu0 0.0
    %309 = vmatpush1.xpose.msra.mxu0 0.0
    %310 = vmatprep.subr.mxu0 0.0
    %311 = vmatpush1.xpose.msra.mxu0 0.0
    %312 = vmatprep.subr.mxu0 0.0
    %313 = vmatpush1.xpose.msra.mxu0 0.0
    %314 = vmatprep.subr.mxu0 0.0
    %315 = vmatpush1.xpose.msra.mxu0 0.0
    %316 = vmatprep.subr.mxu0 0.0
    %317 = vmatpush1.xpose.msra.mxu0 0.0
    %318 = vmatprep.subr.mxu0 0.0
    %319 = vmatpush1.xpose.msra.mxu0 0.0
    %320 = vmatprep.subr.mxu0 0.0
    %321 = vmatpush1.xpose.msra.mxu0 0.0
    %322 = vmatprep.subr.mxu0 0.0
    %323 = vmatpush1.xpose.msra.mxu0 0.0
    %324 = vmatprep.subr.mxu0 0.0
    %325 = vmatpush1.xpose.msra.mxu0 0.0
    %326 = vmatprep.subr.mxu0 0.0
    %327 = vmatpush1.xpose.msra.mxu0 0.0
    %328 = vmatprep.subr.mxu0 0.0
    %329 = vmatpush1.xpose.msra.mxu0 0.0
    %330 = vmatprep.mubr.f32.mxu0 0.0
    %331 = vmatmul.mubr.f32.gmra.mrb[0].mxu0 %v146
    %v332 = vpop.f32.mrb[0].mxu0
    %v333 = vadd.f32 0.0, %v332
    %v334 = vpop.f32.mrb[0].mxu0
    %335 = vdwg.mxu0
    %v336 = vsel %vm265, %v333, 0.0
    %vm337 = vcmask 64512
    %v338 = vsel %vm337, %v336, 0.0
    %339 = vadd.xlane.f32.xlu0 %v338
    %v340 = vpop.xlane.xlu0 %339
    %v341 = vrot.slane %v338, 4
    %v342 = vadd.f32 %v338, %v341
    %v343 = vrot.slane %v342, 2
    %v344 = vadd.f32 %v342, %v343
    %v345 = vrot.slane %v344, 1
    %v346 = vadd.f32 %v344, %v345
    %v347 = vadd.f32 %v340, %v346
    %v348 = vmul.f32 %v333, 2.0
    %v349 = vsub.f32 %v347, %v348
    %v350 = vmax.f32 %v349, 0.0
    %351 = vst.msk [vmem:[#allocation9] sm:$0xff] %vm337, %v350
    %352 = vmatprep.subr.mxu0 0.0
    %353 = vmatpush1.xpose.msra.mxu0 %v151
    %354 = vmatprep.subr.mxu0 0.0
    %355 = vmatpush1.xpose.msra.mxu0 0.0
    %356 = vmatprep.subr.mxu0 0.0
    %357 = vmatpush1.xpose.msra.mxu0 0.0
    %358 = vmatprep.subr.mxu0 0.0
    %359 = vmatpush1.xpose.msra.mxu0 0.0
    %360 = vmatprep.subr.mxu0 0.0
    %361 = vmatpush1.xpose.msra.mxu0 0.0
    %362 = vmatprep.subr.mxu0 0.0
    %363 = vmatpush1.xpose.msra.mxu0 0.0
    %364 = vmatprep.subr.mxu0 0.0
    %365 = vmatpush1.xpose.msra.mxu0 0.0
    %366 = vmatprep.subr.mxu0 0.0
    %367 = vmatpush1.xpose.msra.mxu0 0.0
    %368 = vmatprep.subr.mxu0 0.0
    %369 = vmatpush1.xpose.msra.mxu0 0.0
    %370 = vmatprep.subr.mxu0 0.0
    %371 = vmatpush1.xpose.msra.mxu0 0.0
    %372 = vmatprep.subr.mxu0 0.0
    %373 = vmatpush1.xpose.msra.mxu0 0.0
    %374 = vmatprep.subr.mxu0 0.0
    %375 = vmatpush1.xpose.msra.mxu0 0.0
    %376 = vmatprep.subr.mxu0 0.0
    %377 = vmatpush1.xpose.msra.mxu0 0.0
    %378 = vmatprep.subr.mxu0 0.0
    %379 = vmatpush1.xpose.msra.mxu0 0.0
    %380 = vmatprep.subr.mxu0 0.0
    %381 = vmatpush1.xpose.msra.mxu0 0.0
    %382 = vmatprep.subr.mxu0 0.0
    %383 = vmatpush1.xpose.msra.mxu0 0.0
    %384 = vmatprep.subr.mxu0 0.0
    %385 = vmatpush1.xpose.msra.mxu0 0.0
    %386 = vmatprep.subr.mxu0 0.0
    %387 = vmatpush1.xpose.msra.mxu0 0.0
    %388 = vmatprep.subr.mxu0 0.0
    %389 = vmatpush1.xpose.msra.mxu0 0.0
    %390 = vmatprep.subr.mxu0 0.0
    %391 = vmatpush1.xpose.msra.mxu0 0.0
    %392 = vmatprep.subr.mxu0 0.0
    %393 = vmatpush1.xpose.msra.mxu0 0.0
    %394 = vmatprep.subr.mxu0 0.0
    %395 = vmatpush1.xpose.msra.mxu0 0.0
    %396 = vmatprep.subr.mxu0 0.0
    %397 = vmatpush1.xpose.msra.mxu0 0.0
    %398 = vmatprep.subr.mxu0 0.0
    %399 = vmatpush1.xpose.msra.mxu0 0.0
    %400 = vmatprep.subr.mxu0 0.0
    %401 = vmatpush1.xpose.msra.mxu0 0.0
    %402 = vmatprep.subr.mxu0 0.0
    %403 = vmatpush1.xpose.msra.mxu0 0.0
    %404 = vmatprep.subr.mxu0 0.0
    %405 = vmatpush1.xpose.msra.mxu0 0.0
    %406 = vmatprep.subr.mxu0 0.0
    %407 = vmatpush1.xpose.msra.mxu0 0.0
    %408 = vmatprep.subr.mxu0 0.0
    %409 = vmatpush1.xpose.msra.mxu0 0.0
    %410 = vmatprep.subr.mxu0 0.0
    %411 = vmatpush1.xpose.msra.mxu0 0.0
    %412 = vmatprep.subr.mxu0 0.0
    %413 = vmatpush1.xpose.msra.mxu0 0.0
    %414 = vmatprep.subr.mxu0 0.0
    %415 = vmatpush1.xpose.msra.mxu0 0.0
    %416 = vmatprep.mubr.f32.mxu0 0.0
    %417 = vmatmul.mubr.f32.gmra.mrb[0].mxu0 %v151
    %v418 = vpop.f32.mrb[0].mxu0
    %v419 = vadd.f32 0.0, %v418
    %v420 = vpop.f32.mrb[0].mxu0
    %421 = vdwg.mxu0
    %v422 = vsel %vm265, %v419, 0.0
    %v423 = vsel %vm337, %v422, 0.0
    %424 = vadd.xlane.f32.xlu0 %v423
    %v425 = vpop.xlane.xlu0 %424
    %v426 = vrot.slane %v423, 4
    %v427 = vadd.f32 %v423, %v426
    %v428 = vrot.slane %v427, 2
    %v429 = vadd.f32 %v427, %v428
    %v430 = vrot.slane %v429, 1
    %v431 = vadd.f32 %v429, %v430
    %v432 = vadd.f32 %v425, %v431
    %v433 = vmul.f32 %v419, 2.0
    %v434 = vsub.f32 %v432, %v433
    %v435 = vmax.f32 %v434, 0.0
    %s436 = scalar_lea.vmem [#allocation9], 8
    %437 = vst.msk [vmem:[%s436] sm:$0xff] %vm337, %v435
    // Predicated region
    $region34: #{tpu_custom_call.1} parent=1 // pred_check
      _
    $region35: #{tpu_custom_call.1} parent=1 // pred_check_branch
      %439 = sbr.rel (0) target = $region37
    $region36: #{tpu_custom_call.1} parent=1 // pred_region
      %s441 = ssub.s32 256, 256
      %442 = vsyncadd [#allocation4], %s441
      %s443 = sshll.u32 [#allocation8], 4
      %s444 = int_to_ptr.vmem [resolvable:$true] %s443
      %449 = dma.vmem_to_hbm [thread:$0]  %s444, 256, %s5, [#allocation4], 128, 128, 8
    $region37: #{tpu_custom_call.1} parent=1 // pred_fallthru
      _
    // Predicated region
    $region38: #{tpu_custom_call.1} parent=1 // pred_check
      _
    $region39: #{tpu_custom_call.1} parent=1 // pred_check_branch
      %451 = sbr.rel (0) target = $region41
    $region40: #{tpu_custom_call.1} parent=1 // pred_region
      %s453 = ssub.s32 256, 256
      %454 = vsyncadd [#allocation10], %s453
      %s455 = sshll.u32 [#allocation9], 4
      %s456 = int_to_ptr.vmem [resolvable:$true] %s455
      %461 = dma.vmem_to_hbm [thread:$0]  %s456, 256, %s6, [#allocation10], 128, 128, 8
    $region41: #{tpu_custom_call.1} parent=1 // pred_fallthru
      _
    // Predicated region
    $region42: #{tpu_custom_call.1} parent=1 // pred_check
      _
    $region43: #{tpu_custom_call.1} parent=1 // pred_check_branch
      %463 = sbr.rel (0) target = $region45
    $region44: #{tpu_custom_call.1} parent=1 // pred_region
      %s465 = ssub.s32 256, 256
      %466 = vsyncadd [#allocation10], %s465
      %s467 = sshll.u32 [#allocation11], 4
      %s468 = int_to_ptr.vmem [resolvable:$true] %s467
      %473 = dma.vmem_to_hbm [thread:$0]  %s468, 256, %s7, [#allocation10], 128, 128, 8
    $region45: #{tpu_custom_call.1} parent=1 // pred_fallthru
      _
    // Predicated region
    $region46: #{tpu_custom_call.1} parent=1 // pred_check
      _
    $region47: #{tpu_custom_call.1} parent=1 // pred_check_branch
      %475 = sbr.rel (0) target = $region49
    $region48: #{tpu_custom_call.1} parent=1 // pred_region
      %476 = dma.done [#allocation4], 256
    $region49: #{tpu_custom_call.1} parent=1 // pred_fallthru
      _
    // Predicated region
    $region50: #{tpu_custom_call.1} parent=1 // pred_check
      _
    $region51: #{tpu_custom_call.1} parent=1 // pred_check_branch
      %478 = sbr.rel (0) target = $region53
    $region52: #{tpu_custom_call.1} parent=1 // pred_region
      %479 = dma.done [#allocation10], 256
    $region53: #{tpu_custom_call.1} parent=1 // pred_fallthru
      _
    // Predicated region
    $region54: #{tpu_custom_call.1} parent=1 // pred_check
      _
    $region55: #{tpu_custom_call.1} parent=1 // pred_check_branch
      %481 = sbr.rel (0) target = $region57
    $region56: #{tpu_custom_call.1} parent=1 // pred_region
      %482 = dma.done [#allocation10], 256
    $region57: #{tpu_custom_call.1} parent=1 // pred_fallthru
      _
    %483 = vsyncpa [#allocation3], 1
    %484 = vsyncpa [#allocation6], 1
    %485 = vsyncpa [#allocation4], 1
    %486 = vsyncpa [#allocation10], 1

</llo_original>
